<compile_context>
chip_gen: v5e
topology: v5e:2x2
jax: 0.10.0
libtpu: 0.0.40
codegen_flags: <defaults>
</compile_context>

<pallas_src>
import functools

import jax
import jax.numpy as jnp
from jax.experimental import pallas as pl
from jax.experimental.pallas import tpu as pltpu


def _sepconv_kernel(x_ref, dww_ref, dwb_ref, pwwT_ref, pwb_ref, o_ref,
                    *, K, W, Cin, Cout, P):
    # x_ref:    (P*Cin, Nc)     packed activations; sublane row p*Cin + c holds
    #                           channel c of image-group p, flattened (img, h, w).
    # dww_ref:  (K*K, P*Cin, 1) depthwise weights, one (P*Cin, 1) column per tap.
    # dwb_ref:  (P*Cin, 1)      depthwise bias (tiled over groups).
    # pwwT_ref: (Cin, Cout, 1)  pointwise weights, transposed for leading-axis reads.
    # pwb_ref:  (Cout, 1)       pointwise bias.
    # o_ref:    (P*Cout, Nc)    packed flat output (junk only in cropped columns).
    x = x_ref[...]
    Nc = x.shape[1]

    # ---- Depthwise KxK valid conv, row-sum factored: 2*(K-1) rolls total.
    # Column-shifted copies (shared across all kernel rows): rolled[i] = x[i + kw].
    cols = [x]
    for kw in range(1, K):
        cols.append(pltpu.roll(x, shift=Nc - kw, axis=1))

    acc = None
    for kh in range(K):
        s = cols[0] * dww_ref[kh * K + 0]          # (P*Cin,1) broadcasts over lanes
        for kw in range(1, K):
            s = s + cols[kw] * dww_ref[kh * K + kw]
        if kh > 0:
            # Shift the whole row-sum down by kh rows: s'[i] = s[i + kh*W].
            s = pltpu.roll(s, shift=Nc - kh * W, axis=1)
        acc = s if acc is None else acc + s
    acc = acc + dwb_ref[...]                       # depthwise bias

    # ---- Pointwise 1x1 conv (channel mix), per packed image-group.
    if Cin >= 32 or Cout >= 64:
        # Large channel counts: feed the MXU (contract over Cin without transposing).
        w = pwwT_ref[...].reshape(Cin, Cout)
        for p in range(P):
            a = acc[p * Cin:(p + 1) * Cin, :]
            out = jax.lax.dot_general(
                w, a, dimension_numbers=(((0,), (0,)), ((), ())),
                preferred_element_type=jnp.float32)
            out = out + pwb_ref[...]
            o_ref[p * Cout:(p + 1) * Cout, :] = out.astype(o_ref.dtype)
    else:
        # Small channel counts: Cout x Cin VPU FMAs (outer-product accumulate).
        for p in range(P):
            base = p * Cin
            out = pwwT_ref[0] * acc[base:base + 1, :]          # (Cout,1)x(1,Nc)
            for c in range(1, Cin):
                out = out + pwwT_ref[c] * acc[base + c:base + c + 1, :]
            out = out + pwb_ref[...]
            o_ref[p * Cout:(p + 1) * Cout, :] = out.astype(o_ref.dtype)


def _num_tensorcores_per_chip():
    """Generation-aware TC count: 2 on v7x, 1 on v5e/v6e (and unknown)."""
    try:
        kind = jax.devices()[0].device_kind.lower()
    except Exception:
        return 1, False
    is_v7 = "v7" in kind
    return (2 if is_v7 else 1), is_v7


def _pick_num_chunks(images_per_group, lanes_per_image, bytes_per_lane,
                     n_tc, vmem_budget):
    """Smallest image-aligned, 128-lane-aligned chunk count satisfying the VMEM
    budget and (if possible) giving each TensorCore at least one chunk."""
    total_lanes = images_per_group * lanes_per_image
    min_chunks = max(1, -(-(total_lanes * bytes_per_lane) // vmem_budget))
    want = max(n_tc, min_chunks)
    valid = []
    for d in range(1, images_per_group + 1):
        if images_per_group % d:
            continue
        lanes = (images_per_group // d) * lanes_per_image
        if d > 1 and lanes % 128 != 0:
            continue
        valid.append(d)
    for d in valid:                       # smallest valid divisor >= want
        if d >= want:
            return d
    return valid[-1] if valid else 1      # else the largest valid divisor


def separable_conv(x, dw_w, dw_b, pw_w, pw_b, *, kernel_size=3):
    """x: (B, Cin, H, W) NCHW float32. Returns (B, Cout, H-K+1, W-K+1)."""
    B, Cin, H, W = x.shape
    K = kernel_size
    Cout = pw_w.shape[0]
    Ho, Wo = H - K + 1, W - K + 1

    # --- Sublane packing: put P image-groups on the sublane axis so f32 vregs
    # are fully occupied when Cin < 8.
    P = 1
    if Cin < 8 and 8 % Cin == 0:
        for cand in range(8 // Cin, 0, -1):
            if B % cand == 0:
                P = cand
                break
    Bg = B // P                       # images per group
    lanes_per_image = H * W
    N_g = Bg * lanes_per_image        # lane extent per group

    # --- Generation-aware grid & VMEM budget.
    n_tc, is_v7 = _num_tensorcores_per_chip()
    # Per-lane resident f32 bytes: double-buffered in/out blocks + in-kernel
    # temporaries (x, K rolled copies / row sums, acc, per-group out).
    bytes_per_lane = 4 * (2 * P * Cin + 2 * P * Cout + (K + 2) * P * Cin + P * Cout)
    vmem_cap = (40 << 20) if is_v7 else (96 << 20)    # leave headroom vs physical
    G = _pick_num_chunks(Bg, lanes_per_image, bytes_per_lane, n_tc, vmem_cap // 2)
    Nc = N_g // G
    vmem_limit = int(min(vmem_cap, max(32 << 20, 2 * bytes_per_lane * Nc)))

    # --- Lane-dense layout prep (pure XLA, outside the kernel) ---
    # (B,Cin,H,W) -> (P,Bg,Cin,H,W) -> (P,Cin,Bg,H,W) -> (P*Cin, Bg*H*W)
    x_packed = jnp.transpose(x.reshape(P, Bg, Cin, H, W),
                             (0, 2, 1, 3, 4)).reshape(P * Cin, N_g)
    # Depthwise weights (Cin,1,K,K) -> (K*K, Cin), tiled over groups -> (K*K, P*Cin, 1)
    dww = jnp.transpose(dw_w.reshape(Cin, K * K), (1, 0))
    dww = jnp.tile(dww, (1, P))[:, :, None]
    dwb = jnp.tile(dw_b.reshape(1, Cin), (1, P)).reshape(P * Cin, 1)
    # Pointwise weights (Cout,Cin,1,1) -> transposed (Cin, Cout, 1) for leading-axis reads
    pwwT = jnp.transpose(pw_w.reshape(Cout, Cin), (1, 0))[:, :, None]
    pwb = pw_b.reshape(Cout, 1)

    kernel = functools.partial(_sepconv_kernel, K=K, W=W, Cin=Cin, Cout=Cout, P=P)

    out_flat = pl.pallas_call(
        kernel,
        out_shape=jax.ShapeDtypeStruct((P * Cout, N_g), x.dtype),
        grid_spec=pltpu.PrefetchScalarGridSpec(
            num_scalar_prefetch=0,
            grid=(G,),
            in_specs=[
                pl.BlockSpec((P * Cin, Nc), lambda g: (0, g)),
                pl.BlockSpec((K * K, P * Cin, 1), lambda g: (0, 0, 0)),
                pl.BlockSpec((P * Cin, 1), lambda g: (0, 0)),
                pl.BlockSpec((Cin, Cout, 1), lambda g: (0, 0, 0)),
                pl.BlockSpec((Cout, 1), lambda g: (0, 0)),
            ],
            out_specs=pl.BlockSpec((P * Cout, Nc), lambda g: (0, g)),
        ),
        compiler_params=pltpu.CompilerParams(
            dimension_semantics=("parallel",),
            vmem_limit_bytes=vmem_limit),
    )(x_packed, dww, dwb, pwwT, pwb)

    # --- Un-pack, un-flatten and crop to the valid conv window (XLA plumbing).
    out = out_flat.reshape(P, Cout, Bg, H, W)
    out = jnp.transpose(out, (0, 2, 1, 3, 4)).reshape(B, Cout, H, W)
    return out[:, :, :Ho, :Wo]                     # (B, Cout, Ho, Wo)


def _reference(x, dw_w, dw_b, pw_w, pw_b):
    """Pure-JAX reference using lax conv (matches PyTorch Conv2d semantics)."""
    Cin = x.shape[1]
    y = jax.lax.conv_general_dilated(
        x, dw_w, window_strides=(1, 1), padding="VALID",
        dimension_numbers=("NCHW", "OIHW", "NCHW"),
        feature_group_count=Cin)
    y = y + dw_b[None, :, None, None]
    z = jax.lax.conv_general_dilated(
        y, pw_w, window_strides=(1, 1), padding="VALID",
        dimension_numbers=("NCHW", "OIHW", "NCHW"))
    z = z + pw_b[None, :, None, None]
    return z


if __name__ == "__main__":
    key = jax.random.PRNGKey(0)
    B, Cin, Cout, H, W, K = 2, 4, 8, 16, 16, 3

    k1, k2, k3, k4, k5 = jax.random.split(key, 5)
    x = jax.random.normal(k1, (B, Cin, H, W), jnp.float32)
    # Depthwise Conv2d(nin, nin, 3, groups=nin): weight (nin, 1, 3, 3), bias (nin,)
    dw_w = jax.random.normal(k2, (Cin, 1, K, K), jnp.float32) * 0.1
    dw_b = jax.random.normal(k3, (Cin,), jnp.float32) * 0.1
    # Pointwise Conv2d(nin, nout, 1): weight (nout, nin, 1, 1), bias (nout,)
    pw_w = jax.random.normal(k4, (Cout, Cin, 1, 1), jnp.float32) * 0.1
    pw_b = jax.random.normal(k5, (Cout,), jnp.float32) * 0.1

    out = separable_conv(x, dw_w, dw_b, pw_w, pw_b, kernel_size=K)
    out = jax.block_until_ready(out)

    ref = _reference(x, dw_w, dw_b, pw_w, pw_b)
    assert out.shape == (B, Cout, H - K + 1, W - K + 1), out.shape
    assert jnp.allclose(out, ref, atol=1e-4, rtol=1e-4), "mismatch vs reference"

    print("KERNEL_OK")
</pallas_src>

<mosaic_0001>
module attributes {stable_mosaic.version = 11 : i64} {
  func.func @_sepconv_kernel(%arg0: i32, %arg1: memref<8x256xf32, #tpu.memory_space<vmem>>, %arg2: memref<9x8x1xf32, #tpu.memory_space<vmem>>, %arg3: memref<8x1xf32, #tpu.memory_space<vmem>>, %arg4: memref<4x8x1xf32, #tpu.memory_space<vmem>>, %arg5: memref<8x1xf32, #tpu.memory_space<vmem>>, %arg6: memref<16x256xf32, #tpu.memory_space<vmem>>) attributes {dimension_semantics = [#tpu.dimension_semantics<parallel>], iteration_bounds = array<i64: 1>, scalar_prefetch = 0 : i64, scratch_operands = 0 : i64, tpu.core_type = #tpu.core_type<tc>, window_params = [{transform_indices = @transform_0, window_bounds = array<i64: 8, 256>}, {pipeline_mode = #tpu.pipeline_mode<synchronous>, transform_indices = @transform_1, window_bounds = array<i64: 9, 8, 1>}, {pipeline_mode = #tpu.pipeline_mode<synchronous>, transform_indices = @transform_2, window_bounds = array<i64: 8, 1>}, {pipeline_mode = #tpu.pipeline_mode<synchronous>, transform_indices = @transform_3, window_bounds = array<i64: 4, 8, 1>}, {pipeline_mode = #tpu.pipeline_mode<synchronous>, transform_indices = @transform_4, window_bounds = array<i64: 8, 1>}, {transform_indices = @transform_5, window_bounds = array<i64: 16, 256>}]} {
    %c0 = arith.constant 0 : index
    %c0_0 = arith.constant 0 : index
    %0 = vector.load %arg1[%c0, %c0_0] : memref<8x256xf32, #tpu.memory_space<vmem>>, vector<8x256xf32>
    %c255_i32 = arith.constant 255 : i32
    %1 = tpu.dynamic_rotate %0 by %c255_i32 dim 1 : vector<8x256xf32>, i32 -> vector<8x256xf32>
    %c254_i32 = arith.constant 254 : i32
    %2 = tpu.dynamic_rotate %0 by %c254_i32 dim 1 : vector<8x256xf32>, i32 -> vector<8x256xf32>
    %c0_1 = arith.constant 0 : index
    %c0_2 = arith.constant 0 : index
    %c0_3 = arith.constant 0 : index
    %3 = vector.load %arg2[%c0_1, %c0_2, %c0_3] : memref<9x8x1xf32, #tpu.memory_space<vmem>>, vector<1x8x1xf32>
    %4 = vector.shape_cast %3 : vector<1x8x1xf32> to vector<8x1xf32>
    %5 = vector.broadcast %4 : vector<8x1xf32> to vector<8x256xf32>
    %6 = arith.mulf %0, %5 : vector<8x256xf32>
    %c1 = arith.constant 1 : index
    %c0_4 = arith.constant 0 : index
    %c0_5 = arith.constant 0 : index
    %7 = vector.load %arg2[%c1, %c0_4, %c0_5] : memref<9x8x1xf32, #tpu.memory_space<vmem>>, vector<1x8x1xf32>
    %8 = vector.shape_cast %7 : vector<1x8x1xf32> to vector<8x1xf32>
    %9 = vector.broadcast %8 : vector<8x1xf32> to vector<8x256xf32>
    %10 = arith.mulf %1, %9 : vector<8x256xf32>
    %11 = arith.addf %6, %10 : vector<8x256xf32>
    %c2 = arith.constant 2 : index
    %c0_6 = arith.constant 0 : index
    %c0_7 = arith.constant 0 : index
    %12 = vector.load %arg2[%c2, %c0_6, %c0_7] : memref<9x8x1xf32, #tpu.memory_space<vmem>>, vector<1x8x1xf32>
    %13 = vector.shape_cast %12 : vector<1x8x1xf32> to vector<8x1xf32>
    %14 = vector.broadcast %13 : vector<8x1xf32> to vector<8x256xf32>
    %15 = arith.mulf %2, %14 : vector<8x256xf32>
    %16 = arith.addf %11, %15 : vector<8x256xf32>
    %c3 = arith.constant 3 : index
    %c0_8 = arith.constant 0 : index
    %c0_9 = arith.constant 0 : index
    %17 = vector.load %arg2[%c3, %c0_8, %c0_9] : memref<9x8x1xf32, #tpu.memory_space<vmem>>, vector<1x8x1xf32>
    %18 = vector.shape_cast %17 : vector<1x8x1xf32> to vector<8x1xf32>
    %19 = vector.broadcast %18 : vector<8x1xf32> to vector<8x256xf32>
    %20 = arith.mulf %0, %19 : vector<8x256xf32>
    %c4 = arith.constant 4 : index
    %c0_10 = arith.constant 0 : index
    %c0_11 = arith.constant 0 : index
    %21 = vector.load %arg2[%c4, %c0_10, %c0_11] : memref<9x8x1xf32, #tpu.memory_space<vmem>>, vector<1x8x1xf32>
    %22 = vector.shape_cast %21 : vector<1x8x1xf32> to vector<8x1xf32>
    %23 = vector.broadcast %22 : vector<8x1xf32> to vector<8x256xf32>
    %24 = arith.mulf %1, %23 : vector<8x256xf32>
    %25 = arith.addf %20, %24 : vector<8x256xf32>
    %c5 = arith.constant 5 : index
    %c0_12 = arith.constant 0 : index
    %c0_13 = arith.constant 0 : index
    %26 = vector.load %arg2[%c5, %c0_12, %c0_13] : memref<9x8x1xf32, #tpu.memory_space<vmem>>, vector<1x8x1xf32>
    %27 = vector.shape_cast %26 : vector<1x8x1xf32> to vector<8x1xf32>
    %28 = vector.broadcast %27 : vector<8x1xf32> to vector<8x256xf32>
    %29 = arith.mulf %2, %28 : vector<8x256xf32>
    %30 = arith.addf %25, %29 : vector<8x256xf32>
    %c240_i32 = arith.constant 240 : i32
    %31 = tpu.dynamic_rotate %30 by %c240_i32 dim 1 : vector<8x256xf32>, i32 -> vector<8x256xf32>
    %32 = arith.addf %16, %31 : vector<8x256xf32>
    %c6 = arith.constant 6 : index
    %c0_14 = arith.constant 0 : index
    %c0_15 = arith.constant 0 : index
    %33 = vector.load %arg2[%c6, %c0_14, %c0_15] : memref<9x8x1xf32, #tpu.memory_space<vmem>>, vector<1x8x1xf32>
    %34 = vector.shape_cast %33 : vector<1x8x1xf32> to vector<8x1xf32>
    %35 = vector.broadcast %34 : vector<8x1xf32> to vector<8x256xf32>
    %36 = arith.mulf %0, %35 : vector<8x256xf32>
    %c7 = arith.constant 7 : index
    %c0_16 = arith.constant 0 : index
    %c0_17 = arith.constant 0 : index
    %37 = vector.load %arg2[%c7, %c0_16, %c0_17] : memref<9x8x1xf32, #tpu.memory_space<vmem>>, vector<1x8x1xf32>
    %38 = vector.shape_cast %37 : vector<1x8x1xf32> to vector<8x1xf32>
    %39 = vector.broadcast %38 : vector<8x1xf32> to vector<8x256xf32>
    %40 = arith.mulf %1, %39 : vector<8x256xf32>
    %41 = arith.addf %36, %40 : vector<8x256xf32>
    %c8 = arith.constant 8 : index
    %c0_18 = arith.constant 0 : index
    %c0_19 = arith.constant 0 : index
    %42 = vector.load %arg2[%c8, %c0_18, %c0_19] : memref<9x8x1xf32, #tpu.memory_space<vmem>>, vector<1x8x1xf32>
    %43 = vector.shape_cast %42 : vector<1x8x1xf32> to vector<8x1xf32>
    %44 = vector.broadcast %43 : vector<8x1xf32> to vector<8x256xf32>
    %45 = arith.mulf %2, %44 : vector<8x256xf32>
    %46 = arith.addf %41, %45 : vector<8x256xf32>
    %c224_i32 = arith.constant 224 : i32
    %47 = tpu.dynamic_rotate %46 by %c224_i32 dim 1 : vector<8x256xf32>, i32 -> vector<8x256xf32>
    %48 = arith.addf %32, %47 : vector<8x256xf32>
    %c0_20 = arith.constant 0 : index
    %c0_21 = arith.constant 0 : index
    %49 = vector.load %arg3[%c0_20, %c0_21] : memref<8x1xf32, #tpu.memory_space<vmem>>, vector<8x1xf32>
    %50 = vector.broadcast %49 : vector<8x1xf32> to vector<8x256xf32>
    %51 = arith.addf %48, %50 : vector<8x256xf32>
    %c0_22 = arith.constant 0 : index
    %c0_23 = arith.constant 0 : index
    %c0_24 = arith.constant 0 : index
    %52 = vector.load %arg4[%c0_22, %c0_23, %c0_24] : memref<4x8x1xf32, #tpu.memory_space<vmem>>, vector<1x8x1xf32>
    %53 = vector.shape_cast %52 : vector<1x8x1xf32> to vector<8x1xf32>
    %54 = vector.extract_strided_slice %51 {offsets = [0, 0], sizes = [1, 256], strides = [1, 1]} : vector<8x256xf32> to vector<1x256xf32>
    %55 = vector.broadcast %53 : vector<8x1xf32> to vector<8x256xf32>
    %56 = vector.broadcast %54 : vector<1x256xf32> to vector<8x256xf32>
    %57 = arith.mulf %55, %56 : vector<8x256xf32>
    %c1_25 = arith.constant 1 : index
    %c0_26 = arith.constant 0 : index
    %c0_27 = arith.constant 0 : index
    %58 = vector.load %arg4[%c1_25, %c0_26, %c0_27] : memref<4x8x1xf32, #tpu.memory_space<vmem>>, vector<1x8x1xf32>
    %59 = vector.shape_cast %58 : vector<1x8x1xf32> to vector<8x1xf32>
    %60 = vector.extract_strided_slice %51 {offsets = [1, 0], sizes = [1, 256], strides = [1, 1]} : vector<8x256xf32> to vector<1x256xf32>
    %61 = vector.broadcast %59 : vector<8x1xf32> to vector<8x256xf32>
    %62 = vector.broadcast %60 : vector<1x256xf32> to vector<8x256xf32>
    %63 = arith.mulf %61, %62 : vector<8x256xf32>
    %64 = arith.addf %57, %63 : vector<8x256xf32>
    %c2_28 = arith.constant 2 : index
    %c0_29 = arith.constant 0 : index
    %c0_30 = arith.constant 0 : index
    %65 = vector.load %arg4[%c2_28, %c0_29, %c0_30] : memref<4x8x1xf32, #tpu.memory_space<vmem>>, vector<1x8x1xf32>
    %66 = vector.shape_cast %65 : vector<1x8x1xf32> to vector<8x1xf32>
    %67 = vector.extract_strided_slice %51 {offsets = [2, 0], sizes = [1, 256], strides = [1, 1]} : vector<8x256xf32> to vector<1x256xf32>
    %68 = vector.broadcast %66 : vector<8x1xf32> to vector<8x256xf32>
    %69 = vector.broadcast %67 : vector<1x256xf32> to vector<8x256xf32>
    %70 = arith.mulf %68, %69 : vector<8x256xf32>
    %71 = arith.addf %64, %70 : vector<8x256xf32>
    %c3_31 = arith.constant 3 : index
    %c0_32 = arith.constant 0 : index
    %c0_33 = arith.constant 0 : index
    %72 = vector.load %arg4[%c3_31, %c0_32, %c0_33] : memref<4x8x1xf32, #tpu.memory_space<vmem>>, vector<1x8x1xf32>
    %73 = vector.shape_cast %72 : vector<1x8x1xf32> to vector<8x1xf32>
    %74 = vector.extract_strided_slice %51 {offsets = [3, 0], sizes = [1, 256], strides = [1, 1]} : vector<8x256xf32> to vector<1x256xf32>
    %75 = vector.broadcast %73 : vector<8x1xf32> to vector<8x256xf32>
    %76 = vector.broadcast %74 : vector<1x256xf32> to vector<8x256xf32>
    %77 = arith.mulf %75, %76 : vector<8x256xf32>
    %78 = arith.addf %71, %77 : vector<8x256xf32>
    %c0_34 = arith.constant 0 : index
    %c0_35 = arith.constant 0 : index
    %79 = vector.load %arg5[%c0_34, %c0_35] : memref<8x1xf32, #tpu.memory_space<vmem>>, vector<8x1xf32>
    %80 = vector.broadcast %79 : vector<8x1xf32> to vector<8x256xf32>
    %81 = arith.addf %78, %80 : vector<8x256xf32>
    %c0_36 = arith.constant 0 : index
    %c0_37 = arith.constant 0 : index
    %82 = vector.load %arg6[%c0_36, %c0_37] : memref<16x256xf32, #tpu.memory_space<vmem>>, vector<8x256xf32>
    tpu.vector_store %arg6[%c0_36, %c0_37], %81 {strides = array<i32>} : memref<16x256xf32, #tpu.memory_space<vmem>>, vector<8x256xf32>,
    %c0_38 = arith.constant 0 : index
    %c0_39 = arith.constant 0 : index
    %c0_40 = arith.constant 0 : index
    %83 = vector.load %arg4[%c0_38, %c0_39, %c0_40] : memref<4x8x1xf32, #tpu.memory_space<vmem>>, vector<1x8x1xf32>
    %84 = vector.shape_cast %83 : vector<1x8x1xf32> to vector<8x1xf32>
    %85 = vector.extract_strided_slice %51 {offsets = [4, 0], sizes = [1, 256], strides = [1, 1]} : vector<8x256xf32> to vector<1x256xf32>
    %86 = vector.broadcast %84 : vector<8x1xf32> to vector<8x256xf32>
    %87 = vector.broadcast %85 : vector<1x256xf32> to vector<8x256xf32>
    %88 = arith.mulf %86, %87 : vector<8x256xf32>
    %c1_41 = arith.constant 1 : index
    %c0_42 = arith.constant 0 : index
    %c0_43 = arith.constant 0 : index
    %89 = vector.load %arg4[%c1_41, %c0_42, %c0_43] : memref<4x8x1xf32, #tpu.memory_space<vmem>>, vector<1x8x1xf32>
    %90 = vector.shape_cast %89 : vector<1x8x1xf32> to vector<8x1xf32>
    %91 = vector.extract_strided_slice %51 {offsets = [5, 0], sizes = [1, 256], strides = [1, 1]} : vector<8x256xf32> to vector<1x256xf32>
    %92 = vector.broadcast %90 : vector<8x1xf32> to vector<8x256xf32>
    %93 = vector.broadcast %91 : vector<1x256xf32> to vector<8x256xf32>
    %94 = arith.mulf %92, %93 : vector<8x256xf32>
    %95 = arith.addf %88, %94 : vector<8x256xf32>
    %c2_44 = arith.constant 2 : index
    %c0_45 = arith.constant 0 : index
    %c0_46 = arith.constant 0 : index
    %96 = vector.load %arg4[%c2_44, %c0_45, %c0_46] : memref<4x8x1xf32, #tpu.memory_space<vmem>>, vector<1x8x1xf32>
    %97 = vector.shape_cast %96 : vector<1x8x1xf32> to vector<8x1xf32>
    %98 = vector.extract_strided_slice %51 {offsets = [6, 0], sizes = [1, 256], strides = [1, 1]} : vector<8x256xf32> to vector<1x256xf32>
    %99 = vector.broadcast %97 : vector<8x1xf32> to vector<8x256xf32>
    %100 = vector.broadcast %98 : vector<1x256xf32> to vector<8x256xf32>
    %101 = arith.mulf %99, %100 : vector<8x256xf32>
    %102 = arith.addf %95, %101 : vector<8x256xf32>
    %c3_47 = arith.constant 3 : index
    %c0_48 = arith.constant 0 : index
    %c0_49 = arith.constant 0 : index
    %103 = vector.load %arg4[%c3_47, %c0_48, %c0_49] : memref<4x8x1xf32, #tpu.memory_space<vmem>>, vector<1x8x1xf32>
    %104 = vector.shape_cast %103 : vector<1x8x1xf32> to vector<8x1xf32>
    %105 = vector.extract_strided_slice %51 {offsets = [7, 0], sizes = [1, 256], strides = [1, 1]} : vector<8x256xf32> to vector<1x256xf32>
    %106 = vector.broadcast %104 : vector<8x1xf32> to vector<8x256xf32>
    %107 = vector.broadcast %105 : vector<1x256xf32> to vector<8x256xf32>
    %108 = arith.mulf %106, %107 : vector<8x256xf32>
    %109 = arith.addf %102, %108 : vector<8x256xf32>
    %c0_50 = arith.constant 0 : index
    %c0_51 = arith.constant 0 : index
    %110 = vector.load %arg5[%c0_50, %c0_51] : memref<8x1xf32, #tpu.memory_space<vmem>>, vector<8x1xf32>
    %111 = vector.broadcast %110 : vector<8x1xf32> to vector<8x256xf32>
    %112 = arith.addf %109, %111 : vector<8x256xf32>
    %c8_52 = arith.constant 8 : index
    %c0_53 = arith.constant 0 : index
    %113 = vector.load %arg6[%c8_52, %c0_53] : memref<16x256xf32, #tpu.memory_space<vmem>>, vector<8x256xf32>
    tpu.vector_store %arg6[%c8_52, %c0_53], %112 {strides = array<i32>} : memref<16x256xf32, #tpu.memory_space<vmem>>, vector<8x256xf32>,
    return
  }
  func.func @transform_0(%arg0: i32) -> (i32, i32) {
    %c0_i32 = arith.constant 0 : i32
    %c0_i32_0 = arith.constant 0 : i32
    return %c0_i32, %arg0 : i32, i32
  }
  func.func @transform_1(%arg0: i32) -> (i32, i32, i32) {
    %c0_i32 = arith.constant 0 : i32
    %c0_i32_0 = arith.constant 0 : i32
    %c0_i32_1 = arith.constant 0 : i32
    %c0_i32_2 = arith.constant 0 : i32
    return %c0_i32, %c0_i32_0, %c0_i32_1 : i32, i32, i32
  }
  func.func @transform_2(%arg0: i32) -> (i32, i32) {
    %c0_i32 = arith.constant 0 : i32
    %c0_i32_0 = arith.constant 0 : i32
    %c0_i32_1 = arith.constant 0 : i32
    return %c0_i32, %c0_i32_0 : i32, i32
  }
  func.func @transform_3(%arg0: i32) -> (i32, i32, i32) {
    %c0_i32 = arith.constant 0 : i32
    %c0_i32_0 = arith.constant 0 : i32
    %c0_i32_1 = arith.constant 0 : i32
    %c0_i32_2 = arith.constant 0 : i32
    return %c0_i32, %c0_i32_0, %c0_i32_1 : i32, i32, i32
  }
  func.func @transform_4(%arg0: i32) -> (i32, i32) {
    %c0_i32 = arith.constant 0 : i32
    %c0_i32_0 = arith.constant 0 : i32
    %c0_i32_1 = arith.constant 0 : i32
    return %c0_i32, %c0_i32_0 : i32, i32
  }
  func.func @transform_5(%arg0: i32) -> (i32, i32) {
    %c0_i32 = arith.constant 0 : i32
    %c0_i32_0 = arith.constant 0 : i32
    return %c0_i32, %arg0 : i32, i32
  }
}

</mosaic_0001>

<llo_original>
// kernel: tpu_custom_call.1
$region0: #{tpu_custom_call.1}
  #allocation0 [shape = 'u32[]', space=smem, size = 0x4, offset = 0x4, fixed_abs, tag = 'smem constant byte address 0x4 - core index']
  #allocation1 [shape = 'u32[72,128]{1,0:T(1,128)}', space=vmem, size = 0x9000, scoped, tag = 'internal scratch']
  %s0 = inlined_call_operand.vmem [shape: f32[8,256], index: 0, kind: input, shape index: {}]
  %s1 = inlined_call_operand.vmem [shape: f32[9,8,1], index: 1, kind: input, shape index: {}]
  %s2 = inlined_call_operand.vmem [shape: f32[8,1], index: 2, kind: input, shape index: {}]
  %s3 = inlined_call_operand.vmem [shape: f32[4,8,1], index: 3, kind: input, shape index: {}]
  %s4 = inlined_call_operand.vmem [shape: f32[8,1], index: 4, kind: input, shape index: {}]
  %s5 = inlined_call_operand.hbm [shape: f32[16,256], index: 5, kind: output, shape index: {}]
  %s6 = sld [smem:[#allocation0]]
  $region30: #{tpu_custom_call.1} parent=0
    _
  %s8 = ssub.s32 1, %s6
  %s9 = scalar_select 0, %s8, %s6
  $region1: #{tpu_custom_call.1} parent=0
    #allocation2 [shape = 'u8[16384]{0}', space=vmem, size = 0x4000, scoped, tag = 'output window, operand 0, single buffered']
    #allocation3 [shape = 's32[1]{0}', space=sflag, size = 0x4, scoped, tag = 'scoped memory for tpu_custom_call.1']
    %10 = vsyncpa [#allocation3], 0
    // Predicated region
    $region2: #{tpu_custom_call.1} parent=1 // pred_check
      _
    $region3: #{tpu_custom_call.1} parent=1 // pred_check_branch
      %12 = sbr.rel (0) target = $region5
    $region4: #{tpu_custom_call.1} parent=1 // pred_region
      _
    $region5: #{tpu_custom_call.1} parent=1 // pred_fallthru
      _
    // Predicated region
    $region6: #{tpu_custom_call.1} parent=1 // pred_check
      _
    $region7: #{tpu_custom_call.1} parent=1 // pred_check_branch
      %14 = sbr.rel (0) target = $region9
    $region8: #{tpu_custom_call.1} parent=1 // pred_region
      _
    $region9: #{tpu_custom_call.1} parent=1 // pred_fallthru
      _
    // Predicated region
    $region10: #{tpu_custom_call.1} parent=1 // pred_check
      _
    $region11: #{tpu_custom_call.1} parent=1 // pred_check_branch
      %16 = sbr.rel (0) target = $region13
    $region12: #{tpu_custom_call.1} parent=1 // pred_region
      _
    $region13: #{tpu_custom_call.1} parent=1 // pred_fallthru
      _
    // Predicated region
    $region14: #{tpu_custom_call.1} parent=1 // pred_check
      _
    $region15: #{tpu_custom_call.1} parent=1 // pred_check_branch
      %18 = sbr.rel (0) target = $region17
    $region16: #{tpu_custom_call.1} parent=1 // pred_region
      _
    $region17: #{tpu_custom_call.1} parent=1 // pred_fallthru
      _
    // Predicated region
    $region18: #{tpu_custom_call.1} parent=1 // pred_check
      _
    $region19: #{tpu_custom_call.1} parent=1 // pred_check_branch
      %20 = sbr.rel (0) target = $region21
    $region20: #{tpu_custom_call.1} parent=1 // pred_region
      _
    $region21: #{tpu_custom_call.1} parent=1 // pred_fallthru
      _
    %v21 = vld [vmem:[%s0] sm:$0xff]
    %v22 = vld [vmem:[%s0 + $0x8] sm:$0xff]
    %23 = vrot.lane.b32.xlu0 %v21, 127
    %v24 = vpop.permute.xlu0 %23
    %25 = vrot.lane.b32.xlu0 %v22, 127
    %v26 = vpop.permute.xlu0 %25
    %v27 = vlaneseq
    %v28 = vand.u32 %v27, 127
    %vm29 = vcmp.lt.s32.totalorder %v28, 127
    %v30 = vsel %vm29, %v24, %v26
    %v31 = vsel %vm29, %v26, %v24
    %32 = vrot.lane.b32.xlu0 %v21, 126
    %v33 = vpop.permute.xlu0 %32
    %34 = vrot.lane.b32.xlu0 %v22, 126
    %v35 = vpop.permute.xlu0 %34
    %vm36 = vcmp.lt.s32.totalorder %v28, 126
    %v37 = vsel %vm36, %v33, %v35
    %v38 = vsel %vm36, %v35, %v33
    %v39 = vld [vmem:[%s1] sm:$0xff]
    %41 = vset.pattern.permute.xlu0 0
    %42 = vperm.xlu0 %41, %v39
    %v43 = vpop.permute.xlu0 %42
    %v45 = vmul.f32 %v21, %v43
    %v46 = vmul.f32 %v22, %v43
    %s47 = scalar_lea.vmem %s1, 8
    %v48 = vld [vmem:[%s47] sm:$0xff]
    %50 = vset.pattern.permute.xlu0 0
    %51 = vperm.xlu0 %50, %v48
    %v52 = vpop.permute.xlu0 %51
    %v54 = vmul.f32 %v30, %v52
    %v55 = vmul.f32 %v31, %v52
    %v56 = vadd.f32 %v45, %v54
    %v57 = vadd.f32 %v46, %v55
    %s58 = scalar_lea.vmem %s1, 16
    %v59 = vld [vmem:[%s58] sm:$0xff]
    %61 = vset.pattern.permute.xlu0 0
    %62 = vperm.xlu0 %61, %v59
    %v63 = vpop.permute.xlu0 %62
    %v65 = vmul.f32 %v37, %v63
    %v66 = vmul.f32 %v38, %v63
    %v67 = vadd.f32 %v56, %v65
    %v68 = vadd.f32 %v57, %v66
    %s69 = scalar_lea.vmem %s1, 24
    %v70 = vld [vmem:[%s69] sm:$0xff]
    %72 = vset.pattern.permute.xlu0 0
    %73 = vperm.xlu0 %72, %v70
    %v74 = vpop.permute.xlu0 %73
    %v76 = vmul.f32 %v21, %v74
    %v77 = vmul.f32 %v22, %v74
    %s78 = scalar_lea.vmem %s1, 32
    %v79 = vld [vmem:[%s78] sm:$0xff]
    %81 = vset.pattern.permute.xlu0 0
    %82 = vperm.xlu0 %81, %v79
    %v83 = vpop.permute.xlu0 %82
    %v85 = vmul.f32 %v30, %v83
    %v86 = vmul.f32 %v31, %v83
    %v87 = vadd.f32 %v76, %v85
    %v88 = vadd.f32 %v77, %v86
    %s89 = scalar_lea.vmem %s1, 40
    %v90 = vld [vmem:[%s89] sm:$0xff]
    %92 = vset.pattern.permute.xlu0 0
    %93 = vperm.xlu0 %92, %v90
    %v94 = vpop.permute.xlu0 %93
    %v96 = vmul.f32 %v37, %v94
    %v97 = vmul.f32 %v38, %v94
    %v98 = vadd.f32 %v87, %v96
    %v99 = vadd.f32 %v88, %v97
    %100 = vrot.lane.b32.xlu0 %v98, 112
    %v101 = vpop.permute.xlu0 %100
    %102 = vrot.lane.b32.xlu0 %v99, 112
    %v103 = vpop.permute.xlu0 %102
    %vm104 = vcmp.lt.s32.totalorder %v28, 112
    %v105 = vsel %vm104, %v101, %v103
    %v106 = vsel %vm104, %v103, %v101
    %v107 = vadd.f32 %v67, %v105
    %v108 = vadd.f32 %v68, %v106
    %s109 = scalar_lea.vmem %s1, 48
    %v110 = vld [vmem:[%s109] sm:$0xff]
    %112 = vset.pattern.permute.xlu0 0
    %113 = vperm.xlu0 %112, %v110
    %v114 = vpop.permute.xlu0 %113
    %v116 = vmul.f32 %v21, %v114
    %v117 = vmul.f32 %v22, %v114
    %s118 = scalar_lea.vmem %s1, 56
    %v119 = vld [vmem:[%s118] sm:$0xff]
    %121 = vset.pattern.permute.xlu0 0
    %122 = vperm.xlu0 %121, %v119
    %v123 = vpop.permute.xlu0 %122
    %v125 = vmul.f32 %v30, %v123
    %v126 = vmul.f32 %v31, %v123
    %v127 = vadd.f32 %v116, %v125
    %v128 = vadd.f32 %v117, %v126
    %s129 = scalar_lea.vmem %s1, 64
    %v130 = vld [vmem:[%s129] sm:$0xff]
    %132 = vset.pattern.permute.xlu0 0
    %133 = vperm.xlu0 %132, %v130
    %v134 = vpop.permute.xlu0 %133
    %v136 = vmul.f32 %v37, %v134
    %v137 = vmul.f32 %v38, %v134
    %v138 = vadd.f32 %v127, %v136
    %v139 = vadd.f32 %v128, %v137
    %140 = vrot.lane.b32.xlu0 %v138, 96
    %v141 = vpop.permute.xlu0 %140
    %142 = vrot.lane.b32.xlu0 %v139, 96
    %v143 = vpop.permute.xlu0 %142
    %vm144 = vcmp.lt.s32.totalorder %v28, 96
    %v145 = vsel %vm144, %v141, %v143
    %v146 = vsel %vm144, %v143, %v141
    %v147 = vadd.f32 %v107, %v145
    %v148 = vadd.f32 %v108, %v146
    %v149 = vld [vmem:[%s2] sm:$0xff]
    %151 = vset.pattern.permute.xlu0 0
    %152 = vperm.xlu0 %151, %v149
    %v153 = vpop.permute.xlu0 %152
    %v155 = vadd.f32 %v147, %v153
    %v156 = vadd.f32 %v148, %v153
    %v157 = vld [vmem:[%s3] sm:$0xff]
    %159 = vset.pattern.permute.xlu0 0
    %160 = vperm.xlu0 %159, %v157
    %v161 = vpop.permute.xlu0 %160
    %v163 = vperm.slane %v155, 0
    %v164 = vperm.slane %v156, 0
    %v165 = vmul.f32 %v161, %v163
    %v166 = vmul.f32 %v161, %v164
    %s167 = scalar_lea.vmem %s3, 8
    %v168 = vld [vmem:[%s167] sm:$0xff]
    %170 = vset.pattern.permute.xlu0 0
    %171 = vperm.xlu0 %170, %v168
    %v172 = vpop.permute.xlu0 %171
    %v174 = vperm.slane %v155, 1
    %v175 = vperm.slane %v156, 1
    %v176 = vmul.f32 %v172, %v174
    %v177 = vmul.f32 %v172, %v175
    %v178 = vadd.f32 %v165, %v176
    %v179 = vadd.f32 %v166, %v177
    %s180 = scalar_lea.vmem %s3, 16
    %v181 = vld [vmem:[%s180] sm:$0xff]
    %183 = vset.pattern.permute.xlu0 0
    %184 = vperm.xlu0 %183, %v181
    %v185 = vpop.permute.xlu0 %184
    %v187 = vperm.slane %v155, 2
    %v188 = vperm.slane %v156, 2
    %v189 = vmul.f32 %v185, %v187
    %v190 = vmul.f32 %v185, %v188
    %v191 = vadd.f32 %v178, %v189
    %v192 = vadd.f32 %v179, %v190
    %s193 = scalar_lea.vmem %s3, 24
    %v194 = vld [vmem:[%s193] sm:$0xff]
    %196 = vset.pattern.permute.xlu0 0
    %197 = vperm.xlu0 %196, %v194
    %v198 = vpop.permute.xlu0 %197
    %v200 = vperm.slane %v155, 3
    %v201 = vperm.slane %v156, 3
    %v202 = vmul.f32 %v198, %v200
    %v203 = vmul.f32 %v198, %v201
    %v204 = vadd.f32 %v191, %v202
    %v205 = vadd.f32 %v192, %v203
    %v206 = vld [vmem:[%s4] sm:$0xff]
    %208 = vset.pattern.permute.xlu0 0
    %209 = vperm.xlu0 %208, %v206
    %v210 = vpop.permute.xlu0 %209
    %v212 = vadd.f32 %v204, %v210
    %v213 = vadd.f32 %v205, %v210
    %214 = vst [vmem:[#allocation2] sm:$0xff] %v212
    %215 = vst [vmem:[#allocation2 + $0x8] sm:$0xff] %v213
    %v216 = vld [vmem:[%s3] sm:$0xff]
    %218 = vset.pattern.permute.xlu0 0
    %219 = vperm.xlu0 %218, %v216
    %v220 = vpop.permute.xlu0 %219
    %v222 = vperm.slane %v155, 4
    %v223 = vperm.slane %v156, 4
    %v224 = vmul.f32 %v220, %v222
    %v225 = vmul.f32 %v220, %v223
    %v226 = vld [vmem:[%s167] sm:$0xff]
    %228 = vset.pattern.permute.xlu0 0
    %229 = vperm.xlu0 %228, %v226
    %v230 = vpop.permute.xlu0 %229
    %v232 = vperm.slane %v155, 5
    %v233 = vperm.slane %v156, 5
    %v234 = vmul.f32 %v230, %v232
    %v235 = vmul.f32 %v230, %v233
    %v236 = vadd.f32 %v224, %v234
    %v237 = vadd.f32 %v225, %v235
    %v238 = vld [vmem:[%s180] sm:$0xff]
    %240 = vset.pattern.permute.xlu0 0
    %241 = vperm.xlu0 %240, %v238
    %v242 = vpop.permute.xlu0 %241
    %v244 = vperm.slane %v155, 6
    %v245 = vperm.slane %v156, 6
    %v246 = vmul.f32 %v242, %v244
    %v247 = vmul.f32 %v242, %v245
    %v248 = vadd.f32 %v236, %v246
    %v249 = vadd.f32 %v237, %v247
    %v250 = vld [vmem:[%s193] sm:$0xff]
    %252 = vset.pattern.permute.xlu0 0
    %253 = vperm.xlu0 %252, %v250
    %v254 = vpop.permute.xlu0 %253
    %v256 = vperm.slane %v155, 7
    %v257 = vperm.slane %v156, 7
    %v258 = vmul.f32 %v254, %v256
    %v259 = vmul.f32 %v254, %v257
    %v260 = vadd.f32 %v248, %v258
    %v261 = vadd.f32 %v249, %v259
    %v262 = vld [vmem:[%s4] sm:$0xff]
    %264 = vset.pattern.permute.xlu0 0
    %265 = vperm.xlu0 %264, %v262
    %v266 = vpop.permute.xlu0 %265
    %v268 = vadd.f32 %v260, %v266
    %v269 = vadd.f32 %v261, %v266
    %270 = vst [vmem:[#allocation2 + $0x10] sm:$0xff] %v268
    %271 = vst [vmem:[#allocation2 + $0x18] sm:$0xff] %v269
    // Predicated region
    $region22: #{tpu_custom_call.1} parent=1 // pred_check
      _
    $region23: #{tpu_custom_call.1} parent=1 // pred_check_branch
      %273 = sbr.rel (0) target = $region25
    $region24: #{tpu_custom_call.1} parent=1 // pred_region
      %275 = vsyncadd [#allocation3], 0
      %s276 = sshll.u32 [#allocation2], 4
      %s277 = int_to_ptr.vmem [resolvable:$true] %s276
      %s278 = sshll.u32 %s5, 4
      %s279 = int_to_ptr.hbm [resolvable:$true] %s278
      %284 = dma.vmem_to_hbm [thread:$0]  %s277, 512, %s279, [#allocation3], 256, 256, 16
    $region25: #{tpu_custom_call.1} parent=1 // pred_fallthru
      _
    // Predicated region
    $region26: #{tpu_custom_call.1} parent=1 // pred_check
      _
    $region27: #{tpu_custom_call.1} parent=1 // pred_check_branch
      %286 = sbr.rel (0) target = $region29
    $region28: #{tpu_custom_call.1} parent=1 // pred_region
      %288 = dma.done [#allocation3], 512
    $region29: #{tpu_custom_call.1} parent=1 // pred_fallthru
      _
    %289 = vsyncpa [#allocation3], 1

</llo_original>
